<compile_context>
chip_gen: v5e
topology: v5e:2x2
jax: 0.10.0
libtpu: 0.0.40
codegen_flags: <defaults>
</compile_context>

<pallas_src>
import jax
import jax.numpy as jnp
from jax import lax
from jax.experimental import pallas as pl
from jax.experimental.pallas import tpu as pltpu


def _multi_embed_kernel(idx_ref, tbl_ref, out_ref):
    # idx_ref : (BT, nt)            int32   -- slot-offset indices (idx + slot*vocab)
    # tbl_ref : (nt*vocab, nt*D)    float32 -- block-diagonal concatenated table
    # out_ref : (BT, nt*D)          float32 -- concatenated embeddings, lane-dense
    idx = idx_ref[...]                       # (BT, nt)
    table = tbl_ref[...]                     # (NV, nt*D)
    BT, nt = idx.shape
    NV = table.shape[0]

    iota = lax.broadcasted_iota(jnp.int32, (BT, NV), 1)
    # Multi-hot: exactly one hit per vocab-block per row (blocks are disjoint
    # because indices were offset by slot*vocab in the wrapper).
    multihot = (iota == idx[:, 0:1]).astype(table.dtype)
    for j in range(1, nt):                   # nt is a small Python constant -> unrolled
        multihot = multihot + (iota == idx[:, j : j + 1]).astype(table.dtype)

    # Single MXU matmul; result is already the concatenated [BT, nt*D] output.
    out_ref[...] = jnp.dot(
        multihot, table, preferred_element_type=jnp.float32
    ).astype(out_ref.dtype)


def multi_embedding(x, tables):
    """x: [B, T, num_tokens] int; tables: [num_tokens, vocab, D] f32.

    Returns: [B, T, num_tokens * D] f32 (matches torch.cat(..., dim=-1)).
    """
    B, T, num_tokens = x.shape
    nt, vocab, D = tables.shape
    assert nt == num_tokens
    BT = B * T

    # Slot-offset indices, flattened over (B, T):  [BT, nt]
    offsets = (jnp.arange(nt, dtype=jnp.int32) * vocab)[None, :]
    idx_off = x.reshape(BT, nt).astype(jnp.int32) + offsets

    # Block-diagonal table [nt*vocab, nt*D]; one-time layout prep (in a real
    # model this would be precomputed once from the embedding weights).
    big_table = jnp.zeros((nt * vocab, nt * D), dtype=tables.dtype)
    for i in range(nt):
        big_table = big_table.at[
            i * vocab : (i + 1) * vocab, i * D : (i + 1) * D
        ].set(tables[i])

    out = pl.pallas_call(
        _multi_embed_kernel,
        out_shape=jax.ShapeDtypeStruct((BT, nt * D), jnp.float32),
        in_specs=[
            pl.BlockSpec(memory_space=pltpu.MemorySpace.VMEM),  # idx_off
            pl.BlockSpec(memory_space=pltpu.MemorySpace.VMEM),  # big_table
        ],
        out_specs=pl.BlockSpec(memory_space=pltpu.MemorySpace.VMEM),
    )(idx_off, big_table)

    # Contiguous reshape only (no transpose): [BT, nt*D] -> [B, T, nt*D].
    return out.reshape(B, T, nt * D)


def _reference(x, tables):
    # Pure-JAX reference of the PyTorch forward.
    num_tokens = tables.shape[0]
    embs = [jnp.take(tables[i], x[:, :, i], axis=0) for i in range(num_tokens)]
    return jnp.concatenate(embs, axis=-1)


if __name__ == "__main__":
    # Small shapes consistent with the module.
    vocab_size = 16
    per_token_embed_size = 32
    num_tokens = 4
    B, T = 2, 8

    key = jax.random.PRNGKey(0)
    k_tbl, k_idx = jax.random.split(key)

    # nn.Embedding default init: N(0, 1)
    tables = jax.random.normal(
        k_tbl, (num_tokens, vocab_size, per_token_embed_size), dtype=jnp.float32
    )
    x = jax.random.randint(k_idx, (B, T, num_tokens), 0, vocab_size, dtype=jnp.int32)

    out = multi_embedding(x, tables)
    out = jax.block_until_ready(out)

    ref = _reference(x, tables)
    assert out.shape == (B, T, num_tokens * per_token_embed_size)
    assert jnp.allclose(out, ref, atol=1e-6), "mismatch vs reference"

    print("KERNEL_OK")
</pallas_src>

<mosaic_0001>
module attributes {stable_mosaic.version = 11 : i64} {
  func.func @_multi_embed_kernel(%arg0: memref<16x4xi32, #tpu.memory_space<vmem>>, %arg1: memref<64x128xf32, #tpu.memory_space<vmem>>, %arg2: memref<16x128xf32, #tpu.memory_space<vmem>>) attributes {dimension_semantics = [], scalar_prefetch = 0 : i64, scratch_operands = 0 : i64, tpu.core_type = #tpu.core_type<tc>} {
    %c0 = arith.constant 0 : index
    %c0_0 = arith.constant 0 : index
    %0 = vector.load %arg0[%c0, %c0_0] : memref<16x4xi32, #tpu.memory_space<vmem>>, vector<16x4xi32>
    %c0_1 = arith.constant 0 : index
    %c0_2 = arith.constant 0 : index
    %1 = vector.load %arg1[%c0_1, %c0_2] : memref<64x128xf32, #tpu.memory_space<vmem>>, vector<64x128xf32>
    %2 = tpu.iota {dimensions = array<i32: 1>} : vector<16x64xi32>
    %3 = vector.extract_strided_slice %0 {offsets = [0, 0], sizes = [16, 1], strides = [1, 1]} : vector<16x4xi32> to vector<16x1xi32>
    %4 = vector.broadcast %3 : vector<16x1xi32> to vector<16x64xi32>
    %5 = arith.cmpi eq, %2, %4 : vector<16x64xi32>
    %6 = arith.extui %5 : vector<16x64xi1> to vector<16x64xi32>
    %7 = arith.sitofp %6 : vector<16x64xi32> to vector<16x64xf32>
    %8 = vector.extract_strided_slice %0 {offsets = [0, 1], sizes = [16, 1], strides = [1, 1]} : vector<16x4xi32> to vector<16x1xi32>
    %9 = vector.broadcast %8 : vector<16x1xi32> to vector<16x64xi32>
    %10 = arith.cmpi eq, %2, %9 : vector<16x64xi32>
    %11 = arith.extui %10 : vector<16x64xi1> to vector<16x64xi32>
    %12 = arith.sitofp %11 : vector<16x64xi32> to vector<16x64xf32>
    %13 = arith.addf %7, %12 : vector<16x64xf32>
    %14 = vector.extract_strided_slice %0 {offsets = [0, 2], sizes = [16, 1], strides = [1, 1]} : vector<16x4xi32> to vector<16x1xi32>
    %15 = vector.broadcast %14 : vector<16x1xi32> to vector<16x64xi32>
    %16 = arith.cmpi eq, %2, %15 : vector<16x64xi32>
    %17 = arith.extui %16 : vector<16x64xi1> to vector<16x64xi32>
    %18 = arith.sitofp %17 : vector<16x64xi32> to vector<16x64xf32>
    %19 = arith.addf %13, %18 : vector<16x64xf32>
    %20 = vector.extract_strided_slice %0 {offsets = [0, 3], sizes = [16, 1], strides = [1, 1]} : vector<16x4xi32> to vector<16x1xi32>
    %21 = vector.broadcast %20 : vector<16x1xi32> to vector<16x64xi32>
    %22 = arith.cmpi eq, %2, %21 : vector<16x64xi32>
    %23 = arith.extui %22 : vector<16x64xi1> to vector<16x64xi32>
    %24 = arith.sitofp %23 : vector<16x64xi32> to vector<16x64xf32>
    %25 = arith.addf %19, %24 : vector<16x64xf32>
    %cst = arith.constant dense<0.000000e+00> : vector<16x128xf32>
    %26 = tpu.matmul %25, %1, %cst {dimension_numbers = #tpu.dot_dimension_numbers<[1], [0], [0], [1], [0, 0, 1, 1], [], []>} : vector<16x64xf32>, vector<64x128xf32>, vector<16x128xf32> -> vector<16x128xf32>
    %c0_3 = arith.constant 0 : index
    %c0_4 = arith.constant 0 : index
    %27 = vector.load %arg2[%c0_3, %c0_4] : memref<16x128xf32, #tpu.memory_space<vmem>>, vector<16x128xf32>
    tpu.vector_store %arg2[%c0_3, %c0_4], %26 {strides = array<i32>} : memref<16x128xf32, #tpu.memory_space<vmem>>, vector<16x128xf32>,
    return
  }
}

</mosaic_0001>

<llo_original>
// kernel: tpu_custom_call.1
$region0: #{tpu_custom_call.1}
  #allocation0 [shape = 'u32[]', space=smem, size = 0x4, offset = 0x4, fixed_abs, tag = 'smem constant byte address 0x4 - core index']
  #allocation1 [shape = 'u32[72,128]{1,0:T(1,128)}', space=vmem, size = 0x9000, scoped, tag = 'internal scratch']
  %s0 = inlined_call_operand.vmem [shape: s32[16,4], index: 0, kind: input, shape index: {}]
  %s1 = inlined_call_operand.hbm [shape: f32[64,128], index: 1, kind: input, shape index: {}]
  %s2 = inlined_call_operand.hbm [shape: f32[16,128], index: 2, kind: output, shape index: {}]
  %s3 = sld [smem:[#allocation0]]
  $region22: #{tpu_custom_call.1} parent=0
    _
  %s5 = ssub.s32 1, %s3
  %s6 = scalar_select 0, %s5, %s3
  $region1: #{tpu_custom_call.1} parent=0
    #allocation2 [shape = 'u8[32768]{0}', space=vmem, size = 0x8000, scoped, tag = 'input window, operand 1, single buffered']
    #allocation3 [shape = 's32[1]{0}', space=sflag, size = 0x4, scoped, tag = 'scoped memory for tpu_custom_call.1']
    #allocation4 [shape = 's32[1]{0}', space=sflag, size = 0x4, scoped, tag = 'scoped memory for tpu_custom_call.1']
    #allocation5 [shape = 'u8[8192]{0}', space=vmem, size = 0x2000, scoped, tag = 'output window, operand 0, single buffered']
    %7 = vsyncpa [#allocation3], 0
    %8 = vsyncpa [#allocation4], 0
    // Predicated region
    $region2: #{tpu_custom_call.1} parent=1 // pred_check
      _
    $region3: #{tpu_custom_call.1} parent=1 // pred_check_branch
      %10 = sbr.rel (0) target = $region5
    $region4: #{tpu_custom_call.1} parent=1 // pred_region
      _
    $region5: #{tpu_custom_call.1} parent=1 // pred_fallthru
      _
    // Predicated region
    $region6: #{tpu_custom_call.1} parent=1 // pred_check
      _
    $region7: #{tpu_custom_call.1} parent=1 // pred_check_branch
      %12 = sbr.rel (0) target = $region9
    $region8: #{tpu_custom_call.1} parent=1 // pred_region
      %14 = vsyncadd [#allocation3], 0
      %s15 = sshll.u32 %s1, 4
      %s16 = int_to_ptr.hbm [resolvable:$true] %s15
      %s17 = sshll.u32 [#allocation2], 4
      %s18 = int_to_ptr.vmem [resolvable:$true] %s17
      %23 = dma.hbm_to_vmem [thread:$0]  %s16, 1024, %s18, [#allocation3], 128, 128, 8
    $region9: #{tpu_custom_call.1} parent=1 // pred_fallthru
      _
    // Predicated region
    $region10: #{tpu_custom_call.1} parent=1 // pred_check
      _
    $region11: #{tpu_custom_call.1} parent=1 // pred_check_branch
      %25 = sbr.rel (0) target = $region13
    $region12: #{tpu_custom_call.1} parent=1 // pred_region
      %27 = dma.done [#allocation3], 1024
    $region13: #{tpu_custom_call.1} parent=1 // pred_fallthru
      _
    %v28 = vld [vmem:[%s0] sm:$0xff]
    %v29 = vld [vmem:[%s0 + $0x8] sm:$0xff]
    %v30 = vld [vmem:[#allocation2] sm:$0xff]
    %v31 = vld [vmem:[#allocation2 + $0x8] sm:$0xff]
    %v32 = vld [vmem:[#allocation2 + $0x10] sm:$0xff]
    %v33 = vld [vmem:[#allocation2 + $0x18] sm:$0xff]
    %v34 = vld [vmem:[#allocation2 + $0x20] sm:$0xff]
    %v35 = vld [vmem:[#allocation2 + $0x28] sm:$0xff]
    %v36 = vld [vmem:[#allocation2 + $0x30] sm:$0xff]
    %v37 = vld [vmem:[#allocation2 + $0x38] sm:$0xff]
    %v38 = vlaneseq
    %v39 = vand.u32 %v38, 127
    %40 = vset.pattern.permute.xlu0 0
    %41 = vperm.xlu0 %40, %v28
    %v42 = vpop.permute.xlu0 %41
    %43 = vset.pattern.permute.xlu0 0
    %44 = vperm.xlu0 %43, %v29
    %v45 = vpop.permute.xlu0 %44
    %vm46 = vcmp.eq.s32.totalorder %v39, %v42
    %vm47 = vcmp.eq.s32.totalorder %v39, %v45
    %v48 = vsel %vm46, 1, 0
    %v49 = vsel %vm47, 1, 0
    %v50 = vcvt.s32.f32 %v48
    %v51 = vcvt.s32.f32 %v49
    %52 = vset.pattern.permute.xlu0 1
    %53 = vperm.xlu0 %52, %v28
    %v54 = vpop.permute.xlu0 %53
    %55 = vset.pattern.permute.xlu0 1
    %56 = vperm.xlu0 %55, %v29
    %v57 = vpop.permute.xlu0 %56
    %vm58 = vcmp.eq.s32.totalorder %v39, %v54
    %vm59 = vcmp.eq.s32.totalorder %v39, %v57
    %v60 = vsel %vm58, 1, 0
    %v61 = vsel %vm59, 1, 0
    %v62 = vcvt.s32.f32 %v60
    %v63 = vcvt.s32.f32 %v61
    %v64 = vadd.f32 %v50, %v62
    %v65 = vadd.f32 %v51, %v63
    %66 = vset.pattern.permute.xlu0 2
    %67 = vperm.xlu0 %66, %v28
    %v68 = vpop.permute.xlu0 %67
    %69 = vset.pattern.permute.xlu0 2
    %70 = vperm.xlu0 %69, %v29
    %v71 = vpop.permute.xlu0 %70
    %vm72 = vcmp.eq.s32.totalorder %v39, %v68
    %vm73 = vcmp.eq.s32.totalorder %v39, %v71
    %v74 = vsel %vm72, 1, 0
    %v75 = vsel %vm73, 1, 0
    %v76 = vcvt.s32.f32 %v74
    %v77 = vcvt.s32.f32 %v75
    %v78 = vadd.f32 %v64, %v76
    %v79 = vadd.f32 %v65, %v77
    %80 = vset.pattern.permute.xlu0 3
    %81 = vperm.xlu0 %80, %v28
    %v82 = vpop.permute.xlu0 %81
    %83 = vset.pattern.permute.xlu0 3
    %84 = vperm.xlu0 %83, %v29
    %v85 = vpop.permute.xlu0 %84
    %vm86 = vcmp.eq.s32.totalorder %v39, %v82
    %vm87 = vcmp.eq.s32.totalorder %v39, %v85
    %v88 = vsel %vm86, 1, 0
    %v89 = vsel %vm87, 1, 0
    %v90 = vcvt.s32.f32 %v88
    %v91 = vcvt.s32.f32 %v89
    %v92 = vadd.f32 %v78, %v90
    %v93 = vadd.f32 %v79, %v91
    %vm94 = vcmask 523264
    %v96 = vsel %vm94, %v92, 0
    %v99 = vsel %vm94, %v93, 0
    %101 = vmatpush.msra.mxu0 0.0
    %102 = vmatpush.msra.mxu0 0.0
    %103 = vmatpush.msra.mxu0 0.0
    %104 = vmatpush.msra.mxu0 0.0
    %105 = vmatpush.msra.mxu0 0.0
    %106 = vmatpush.msra.mxu0 0.0
    %107 = vmatpush.msra.mxu0 0.0
    %108 = vmatpush.msra.mxu0 0.0
    %109 = vmatpush.msra.mxu0 %v37
    %110 = vmatpush.msra.mxu0 %v36
    %111 = vmatpush.msra.mxu0 %v35
    %112 = vmatpush.msra.mxu0 %v34
    %113 = vmatpush.msra.mxu0 %v33
    %114 = vmatpush.msra.mxu0 %v32
    %115 = vmatpush.msra.mxu0 %v31
    %116 = vmatpush.msra.mxu0 %v30
    %117 = vmatmul.f32.gmra.mxu0 %v96
    %v118 = vpop.f32.mrf.mxu0
    %v119 = vadd.f32 0.0, %v118
    %120 = vmatmul.f32.gmra.mxu0 %v99
    %v121 = vpop.f32.mrf.mxu0
    %v122 = vadd.f32 0.0, %v121
    %123 = vdwg.mxu0
    %124 = vst [vmem:[#allocation5] sm:$0xff] %v119
    %125 = vst [vmem:[#allocation5 + $0x8] sm:$0xff] %v122
    // Predicated region
    $region14: #{tpu_custom_call.1} parent=1 // pred_check
      _
    $region15: #{tpu_custom_call.1} parent=1 // pred_check_branch
      %127 = sbr.rel (0) target = $region17
    $region16: #{tpu_custom_call.1} parent=1 // pred_region
      %129 = vsyncadd [#allocation4], 0
      %s130 = sshll.u32 [#allocation5], 4
      %s131 = int_to_ptr.vmem [resolvable:$true] %s130
      %s132 = sshll.u32 %s2, 4
      %s133 = int_to_ptr.hbm [resolvable:$true] %s132
      %138 = dma.vmem_to_hbm [thread:$0]  %s131, 256, %s133, [#allocation4], 128, 128, 8
    $region17: #{tpu_custom_call.1} parent=1 // pred_fallthru
      _
    // Predicated region
    $region18: #{tpu_custom_call.1} parent=1 // pred_check
      _
    $region19: #{tpu_custom_call.1} parent=1 // pred_check_branch
      %140 = sbr.rel (0) target = $region21
    $region20: #{tpu_custom_call.1} parent=1 // pred_region
      %142 = dma.done [#allocation4], 256
    $region21: #{tpu_custom_call.1} parent=1 // pred_fallthru
      _
    %143 = vsyncpa [#allocation3], 1
    %144 = vsyncpa [#allocation4], 1

</llo_original>
